<compile_context>
chip_gen: v7x
topology: tpu7x:2x2x1
jax: 0.10.0
libtpu: 0.0.40
codegen_flags: <defaults>
</compile_context>

<pallas_src>
import jax
import jax.numpy as jnp
from jax.experimental import pallas as pl
from jax.experimental.pallas import tpu as pltpu

IN_DIM = 99
H1 = 128
H2 = 256
H3 = 128
OUT_DIM = 28
OUT_PAD = 128    # lane-aligned output feature dim (28 -> 128, sliced in wrapper)
BN_EPS = 1e-5


def _round_up(v, m):
    return ((v + m - 1) // m) * m


def dnn_kernel(x_ref,
               w1_ref, b1_ref,
               w2_ref, b2_ref,
               w3_ref, b3_ref,
               w4_ref, b4_ref,
               o_ref):
    # x tile: (bm, 99) float -> bf16 for the MXU; every matmul accumulates in f32.
    x = x_ref[...].astype(jnp.bfloat16)

    h = jnp.dot(x, w1_ref[...], preferred_element_type=jnp.float32) + b1_ref[...]
    h = jnp.maximum(h, 0.0).astype(jnp.bfloat16)          # bn1 folded into fc2

    h = jnp.dot(h, w2_ref[...], preferred_element_type=jnp.float32) + b2_ref[...]
    h = jnp.maximum(h, 0.0).astype(jnp.bfloat16)          # bn2 folded into fc3

    h = jnp.dot(h, w3_ref[...], preferred_element_type=jnp.float32) + b3_ref[...]
    h = jnp.maximum(h, 0.0).astype(jnp.bfloat16)          # dropout: identity (eval)

    o = jnp.dot(h, w4_ref[...], preferred_element_type=jnp.float32) + b4_ref[...]
    o_ref[...] = o.astype(jnp.bfloat16)                   # bf16 store; f32 cast in wrapper


def prepare_params(params):
    """One-time: fold eval-mode BN into downstream Linears, pad, cast to bf16."""
    (w1, b1, g1, be1, rm1, rv1,
     w2, b2, g2, be2, rm2, rv2,
     w3, b3,
     w4, b4) = params

    # a1 = relu1 * s1 + t1 ; fc2(a1) = relu1 @ (s1[:,None]*W2^T) + (t1 @ W2^T + b2)
    s1 = g1 / jnp.sqrt(rv1 + BN_EPS)
    t1 = be1 - rm1 * s1
    s2 = g2 / jnp.sqrt(rv2 + BN_EPS)
    t2 = be2 - rm2 * s2

    w1t = w1.T                                   # (99, 128)
    w2t = s1[:, None] * w2.T                     # (128, 256)  bn1 folded
    b2f = b2 + t1 @ w2.T
    w3t = s2[:, None] * w3.T                     # (256, 128)  bn2 folded
    b3f = b3 + t2 @ w3.T

    # Lane-pad only the output feature dim (28 -> 128); pads are zero.
    w4p = jnp.zeros((H3, OUT_PAD), jnp.float32).at[:, :OUT_DIM].set(w4.T)
    b4p = jnp.zeros((OUT_PAD,), jnp.float32).at[:OUT_DIM].set(b4)

    bf = lambda a: a.astype(jnp.bfloat16)        # MXU inputs in bf16
    row = lambda v: v.reshape(1, -1).astype(jnp.float32)   # biases stay f32
    return (bf(w1t), row(b1),
            bf(w2t), row(b2f),
            bf(w3t), row(b3f),
            bf(w4p), row(b4p))


def dnn_forward(x, kernel_params, *, bm=1024):
    """x: (B, 99) float; kernel_params from prepare_params(); returns (B, 28) f32."""
    B = x.shape[0]
    (w1k, b1r, w2k, b2r, w3k, b3r, w4k, b4r) = kernel_params

    # Batch tile: multiple of 16 (bf16 sublane packing), capped at the requested
    # bm.  For B >= 32, also cap at ceil(B/2) so the grid has >= 2 steps and the
    # "parallel" axis shards across both v7x TensorCores (no effect on v5e/v6e).
    bm_eff = min(bm, _round_up(B, 16))
    if B >= 32:
        bm_eff = min(bm_eff, _round_up(pl.cdiv(B, 2), 16))
    grid_m = pl.cdiv(B, bm_eff)   # ragged last tile handled by boundary masking

    weight_bytes = 2 * (IN_DIM * H1 + H1 * H2 + H2 * H3 + H3 * OUT_PAD) \
        + 4 * (H1 + H2 + H3 + OUT_PAD)
    cost = pl.CostEstimate(
        flops=2 * B * (IN_DIM * H1 + H1 * H2 + H2 * H3 + H3 * OUT_PAD),
        transcendentals=0,
        bytes_accessed=B * (IN_DIM * x.dtype.itemsize + OUT_PAD * 2) + weight_bytes,
    )

    def full_spec(shape):
        return pl.BlockSpec(shape, lambda i: (0, 0))

    out = pl.pallas_call(
        dnn_kernel,
        out_shape=jax.ShapeDtypeStruct((B, OUT_PAD), jnp.bfloat16),
        grid=(grid_m,),
        in_specs=[
            pl.BlockSpec((bm_eff, IN_DIM), lambda i: (i, 0)),   # x tile over batch
            full_spec((IN_DIM, H1)), full_spec((1, H1)),
            full_spec((H1, H2)), full_spec((1, H2)),
            full_spec((H2, H3)), full_spec((1, H3)),
            full_spec((H3, OUT_PAD)), full_spec((1, OUT_PAD)),
        ],
        out_specs=pl.BlockSpec((bm_eff, OUT_PAD), lambda i: (i, 0)),
        compiler_params=pltpu.CompilerParams(
            dimension_semantics=("parallel",),
            vmem_limit_bytes=32 * 1024 * 1024,
        ),
        cost_estimate=cost,
    )(x,
      w1k, b1r,
      w2k, b2r,
      w3k, b3r,
      w4k, b4r)

    return out[:, :OUT_DIM].astype(jnp.float32)


def init_params(key):
    ks = jax.random.split(key, 8)

    def linear(kw, kb, out_f, in_f):
        bound = 1.0 / jnp.sqrt(in_f)
        w = jax.random.uniform(kw, (out_f, in_f), jnp.float32, -bound, bound)
        b = jax.random.uniform(kb, (out_f,), jnp.float32, -bound, bound)
        return w, b

    w1, b1 = linear(ks[0], ks[1], H1, IN_DIM)
    w2, b2 = linear(ks[2], ks[3], H2, H1)
    w3, b3 = linear(ks[4], ks[5], H3, H2)
    w4, b4 = linear(ks[6], ks[7], OUT_DIM, H3)

    # BatchNorm1d defaults: gamma=1, beta=0, running_mean=0, running_var=1
    g1, be1 = jnp.ones((H1,), jnp.float32), jnp.zeros((H1,), jnp.float32)
    rm1, rv1 = jnp.zeros((H1,), jnp.float32), jnp.ones((H1,), jnp.float32)
    g2, be2 = jnp.ones((H2,), jnp.float32), jnp.zeros((H2,), jnp.float32)
    rm2, rv2 = jnp.zeros((H2,), jnp.float32), jnp.ones((H2,), jnp.float32)

    return (w1, b1, g1, be1, rm1, rv1,
            w2, b2, g2, be2, rm2, rv2,
            w3, b3,
            w4, b4)


def dnn_reference(x, params):
    (w1, b1, g1, be1, rm1, rv1,
     w2, b2, g2, be2, rm2, rv2,
     w3, b3,
     w4, b4) = params
    h = jnp.maximum(x @ w1.T + b1, 0.0)
    h = (h - rm1) / jnp.sqrt(rv1 + BN_EPS) * g1 + be1
    h = jnp.maximum(h @ w2.T + b2, 0.0)
    h = (h - rm2) / jnp.sqrt(rv2 + BN_EPS) * g2 + be2
    h = jnp.maximum(h @ w3.T + b3, 0.0)
    return h @ w4.T + b4


if __name__ == "__main__":
    key = jax.random.PRNGKey(0)
    k_param, k_x = jax.random.split(key)
    params = init_params(k_param)
    kparams = prepare_params(params)        # one-time weight prep (BN fold, pad, bf16)
    kparams = jax.block_until_ready(kparams)

    # Small smoke-test batch; deliberately NOT a multiple of the tile to exercise
    # the ragged boundary tile and the >=2-grid-step (dual-TC) path.
    B = 37
    x = jax.random.normal(k_x, (B, IN_DIM), jnp.float32)

    out = dnn_forward(x, kparams, bm=1024)
    out = jax.block_until_ready(out)

    ref = dnn_reference(x, params)
    assert out.shape == (B, OUT_DIM)
    # bf16 MXU inputs / bf16 output store with f32 accumulation => loosened tolerance.
    max_err = float(jnp.max(jnp.abs(out - ref)))
    assert jnp.allclose(out, ref, atol=2.5e-2, rtol=2.5e-2), \
        f"mismatch vs reference (max abs err {max_err})"

    print("KERNEL_OK")
</pallas_src>

<mosaic_0001>
module attributes {stable_mosaic.version = 11 : i64} {
  func.func @dnn_kernel(%arg0: i32, %arg1: memref<32x99xf32, #tpu.memory_space<vmem>>, %arg2: memref<99x128xbf16, #tpu.memory_space<vmem>>, %arg3: memref<1x128xf32, #tpu.memory_space<vmem>>, %arg4: memref<128x256xbf16, #tpu.memory_space<vmem>>, %arg5: memref<1x256xf32, #tpu.memory_space<vmem>>, %arg6: memref<256x128xbf16, #tpu.memory_space<vmem>>, %arg7: memref<1x128xf32, #tpu.memory_space<vmem>>, %arg8: memref<128x128xbf16, #tpu.memory_space<vmem>>, %arg9: memref<1x128xf32, #tpu.memory_space<vmem>>, %arg10: memref<32x128xbf16, #tpu.memory_space<vmem>>) attributes {dimension_semantics = [#tpu.dimension_semantics<parallel>], iteration_bounds = array<i64: 2>, scalar_prefetch = 0 : i64, scratch_operands = 0 : i64, tpu.core_type = #tpu.core_type<tc>, window_params = [{transform_indices = @transform_0, window_bounds = array<i64: 32, 99>}, {pipeline_mode = #tpu.pipeline_mode<synchronous>, transform_indices = @transform_1, window_bounds = array<i64: 99, 128>}, {pipeline_mode = #tpu.pipeline_mode<synchronous>, transform_indices = @transform_2, window_bounds = array<i64: 1, 128>}, {pipeline_mode = #tpu.pipeline_mode<synchronous>, transform_indices = @transform_3, window_bounds = array<i64: 128, 256>}, {pipeline_mode = #tpu.pipeline_mode<synchronous>, transform_indices = @transform_4, window_bounds = array<i64: 1, 256>}, {pipeline_mode = #tpu.pipeline_mode<synchronous>, transform_indices = @transform_5, window_bounds = array<i64: 256, 128>}, {pipeline_mode = #tpu.pipeline_mode<synchronous>, transform_indices = @transform_6, window_bounds = array<i64: 1, 128>}, {pipeline_mode = #tpu.pipeline_mode<synchronous>, transform_indices = @transform_7, window_bounds = array<i64: 128, 128>}, {pipeline_mode = #tpu.pipeline_mode<synchronous>, transform_indices = @transform_8, window_bounds = array<i64: 1, 128>}, {transform_indices = @transform_9, window_bounds = array<i64: 32, 128>}]} {
    %c0 = arith.constant 0 : index
    %c0_0 = arith.constant 0 : index
    %0 = vector.load %arg1[%c0, %c0_0] : memref<32x99xf32, #tpu.memory_space<vmem>>, vector<32x99xf32>
    %1 = arith.truncf %0 : vector<32x99xf32> to vector<32x99xbf16>
    %c0_1 = arith.constant 0 : index
    %c0_2 = arith.constant 0 : index
    %2 = vector.load %arg2[%c0_1, %c0_2] : memref<99x128xbf16, #tpu.memory_space<vmem>>, vector<99x128xbf16>
    %cst = arith.constant dense<0.000000e+00> : vector<32x128xf32>
    %3 = tpu.matmul %1, %2, %cst {dimension_numbers = #tpu.dot_dimension_numbers<[1], [0], [0], [1], [0, 0, 1, 1], [], []>} : vector<32x99xbf16>, vector<99x128xbf16>, vector<32x128xf32> -> vector<32x128xf32>
    %c0_3 = arith.constant 0 : index
    %c0_4 = arith.constant 0 : index
    %4 = vector.load %arg3[%c0_3, %c0_4] : memref<1x128xf32, #tpu.memory_space<vmem>>, vector<1x128xf32>
    %5 = vector.broadcast %4 : vector<1x128xf32> to vector<32x128xf32>
    %6 = arith.addf %3, %5 : vector<32x128xf32>
    %cst_5 = arith.constant 0.000000e+00 : f32
    %7 = vector.broadcast %cst_5 : f32 to vector<32x128xf32>
    %8 = arith.maximumf %6, %7 : vector<32x128xf32>
    %9 = arith.truncf %8 : vector<32x128xf32> to vector<32x128xbf16>
    %c0_6 = arith.constant 0 : index
    %c0_7 = arith.constant 0 : index
    %10 = vector.load %arg4[%c0_6, %c0_7] : memref<128x256xbf16, #tpu.memory_space<vmem>>, vector<128x256xbf16>
    %cst_8 = arith.constant dense<0.000000e+00> : vector<32x256xf32>
    %11 = tpu.matmul %9, %10, %cst_8 {dimension_numbers = #tpu.dot_dimension_numbers<[1], [0], [0], [1], [0, 0, 1, 1], [], []>} : vector<32x128xbf16>, vector<128x256xbf16>, vector<32x256xf32> -> vector<32x256xf32>
    %c0_9 = arith.constant 0 : index
    %c0_10 = arith.constant 0 : index
    %12 = vector.load %arg5[%c0_9, %c0_10] : memref<1x256xf32, #tpu.memory_space<vmem>>, vector<1x256xf32>
    %13 = vector.broadcast %12 : vector<1x256xf32> to vector<32x256xf32>
    %14 = arith.addf %11, %13 : vector<32x256xf32>
    %cst_11 = arith.constant 0.000000e+00 : f32
    %15 = vector.broadcast %cst_11 : f32 to vector<32x256xf32>
    %16 = arith.maximumf %14, %15 : vector<32x256xf32>
    %17 = arith.truncf %16 : vector<32x256xf32> to vector<32x256xbf16>
    %c0_12 = arith.constant 0 : index
    %c0_13 = arith.constant 0 : index
    %18 = vector.load %arg6[%c0_12, %c0_13] : memref<256x128xbf16, #tpu.memory_space<vmem>>, vector<256x128xbf16>
    %cst_14 = arith.constant dense<0.000000e+00> : vector<32x128xf32>
    %19 = tpu.matmul %17, %18, %cst_14 {dimension_numbers = #tpu.dot_dimension_numbers<[1], [0], [0], [1], [0, 0, 1, 1], [], []>} : vector<32x256xbf16>, vector<256x128xbf16>, vector<32x128xf32> -> vector<32x128xf32>
    %c0_15 = arith.constant 0 : index
    %c0_16 = arith.constant 0 : index
    %20 = vector.load %arg7[%c0_15, %c0_16] : memref<1x128xf32, #tpu.memory_space<vmem>>, vector<1x128xf32>
    %21 = vector.broadcast %20 : vector<1x128xf32> to vector<32x128xf32>
    %22 = arith.addf %19, %21 : vector<32x128xf32>
    %cst_17 = arith.constant 0.000000e+00 : f32
    %23 = vector.broadcast %cst_17 : f32 to vector<32x128xf32>
    %24 = arith.maximumf %22, %23 : vector<32x128xf32>
    %25 = arith.truncf %24 : vector<32x128xf32> to vector<32x128xbf16>
    %c0_18 = arith.constant 0 : index
    %c0_19 = arith.constant 0 : index
    %26 = vector.load %arg8[%c0_18, %c0_19] : memref<128x128xbf16, #tpu.memory_space<vmem>>, vector<128x128xbf16>
    %cst_20 = arith.constant dense<0.000000e+00> : vector<32x128xf32>
    %27 = tpu.matmul %25, %26, %cst_20 {dimension_numbers = #tpu.dot_dimension_numbers<[1], [0], [0], [1], [0, 0, 1, 1], [], []>} : vector<32x128xbf16>, vector<128x128xbf16>, vector<32x128xf32> -> vector<32x128xf32>
    %c0_21 = arith.constant 0 : index
    %c0_22 = arith.constant 0 : index
    %28 = vector.load %arg9[%c0_21, %c0_22] : memref<1x128xf32, #tpu.memory_space<vmem>>, vector<1x128xf32>
    %29 = vector.broadcast %28 : vector<1x128xf32> to vector<32x128xf32>
    %30 = arith.addf %27, %29 : vector<32x128xf32>
    %31 = arith.truncf %30 : vector<32x128xf32> to vector<32x128xbf16>
    %c0_23 = arith.constant 0 : index
    %c0_24 = arith.constant 0 : index
    %32 = vector.load %arg10[%c0_23, %c0_24] : memref<32x128xbf16, #tpu.memory_space<vmem>>, vector<32x128xbf16>
    tpu.vector_store %arg10[%c0_23, %c0_24], %31 {strides = array<i32>} : memref<32x128xbf16, #tpu.memory_space<vmem>>, vector<32x128xbf16>,
    return
  }
  func.func @transform_0(%arg0: i32) -> (i32, i32) {
    %c0_i32 = arith.constant 0 : i32
    %c0_i32_0 = arith.constant 0 : i32
    return %arg0, %c0_i32 : i32, i32
  }
  func.func @transform_1(%arg0: i32) -> (i32, i32) {
    %c0_i32 = arith.constant 0 : i32
    %c0_i32_0 = arith.constant 0 : i32
    %c0_i32_1 = arith.constant 0 : i32
    return %c0_i32, %c0_i32_0 : i32, i32
  }
  func.func @transform_2(%arg0: i32) -> (i32, i32) {
    %c0_i32 = arith.constant 0 : i32
    %c0_i32_0 = arith.constant 0 : i32
    %c0_i32_1 = arith.constant 0 : i32
    return %c0_i32, %c0_i32_0 : i32, i32
  }
  func.func @transform_3(%arg0: i32) -> (i32, i32) {
    %c0_i32 = arith.constant 0 : i32
    %c0_i32_0 = arith.constant 0 : i32
    %c0_i32_1 = arith.constant 0 : i32
    return %c0_i32, %c0_i32_0 : i32, i32
  }
  func.func @transform_4(%arg0: i32) -> (i32, i32) {
    %c0_i32 = arith.constant 0 : i32
    %c0_i32_0 = arith.constant 0 : i32
    %c0_i32_1 = arith.constant 0 : i32
    return %c0_i32, %c0_i32_0 : i32, i32
  }
  func.func @transform_5(%arg0: i32) -> (i32, i32) {
    %c0_i32 = arith.constant 0 : i32
    %c0_i32_0 = arith.constant 0 : i32
    %c0_i32_1 = arith.constant 0 : i32
    return %c0_i32, %c0_i32_0 : i32, i32
  }
  func.func @transform_6(%arg0: i32) -> (i32, i32) {
    %c0_i32 = arith.constant 0 : i32
    %c0_i32_0 = arith.constant 0 : i32
    %c0_i32_1 = arith.constant 0 : i32
    return %c0_i32, %c0_i32_0 : i32, i32
  }
  func.func @transform_7(%arg0: i32) -> (i32, i32) {
    %c0_i32 = arith.constant 0 : i32
    %c0_i32_0 = arith.constant 0 : i32
    %c0_i32_1 = arith.constant 0 : i32
    return %c0_i32, %c0_i32_0 : i32, i32
  }
  func.func @transform_8(%arg0: i32) -> (i32, i32) {
    %c0_i32 = arith.constant 0 : i32
    %c0_i32_0 = arith.constant 0 : i32
    %c0_i32_1 = arith.constant 0 : i32
    return %c0_i32, %c0_i32_0 : i32, i32
  }
  func.func @transform_9(%arg0: i32) -> (i32, i32) {
    %c0_i32 = arith.constant 0 : i32
    %c0_i32_0 = arith.constant 0 : i32
    return %arg0, %c0_i32 : i32, i32
  }
}

</mosaic_0001>

<llo_original>
// kernel: tpu_custom_call.1
$region0: #{tpu_custom_call.1}
  #allocation0 [shape = 'u32[]', space=smem, size = 0x4, offset = 0x4, fixed_abs, tag = 'smem constant byte address 0x4 - core index']
  #allocation1 [shape = 'u32[144,128]{1,0:T(1,128)}', space=vmem, size = 0x12000, scoped, tag = 'internal scratch']
  %s0 = inlined_call_operand.hbm [shape: f32[37,99], index: 0, kind: input, shape index: {}]
  %s1 = inlined_call_operand.hbm [shape: bf16[99,128], index: 1, kind: input, shape index: {}]
  %s2 = inlined_call_operand.vmem [shape: f32[1,128], index: 2, kind: input, shape index: {}]
  %s3 = inlined_call_operand.hbm [shape: bf16[128,256], index: 3, kind: input, shape index: {}]
  %s4 = inlined_call_operand.vmem [shape: f32[1,256], index: 4, kind: input, shape index: {}]
  %s5 = inlined_call_operand.hbm [shape: bf16[256,128], index: 5, kind: input, shape index: {}]
  %s6 = inlined_call_operand.vmem [shape: f32[1,128], index: 6, kind: input, shape index: {}]
  %s7 = inlined_call_operand.hbm [shape: bf16[128,128], index: 7, kind: input, shape index: {}]
  %s8 = inlined_call_operand.vmem [shape: f32[1,128], index: 8, kind: input, shape index: {}]
  %s9 = inlined_call_operand.hbm [shape: bf16[37,128], index: 9, kind: output, shape index: {}]
  %s10 = sld [smem:[#allocation0]]
  $region89: #{tpu_custom_call.1} parent=0
    _
  %s12 = ssub.s32 1, %s10
  %s13 = scalar_select 0, %s12, %s10
  $region1: #{tpu_custom_call.1} parent=0
    #allocation2 [shape = 'u8[32768]{0}', space=vmem, size = 0x8000, scoped, tag = 'input window, operand 0']
    #allocation3 [shape = 's32[2]{0}', space=sflag, size = 0x8, scoped, tag = 'scoped memory for tpu_custom_call.1']
    #allocation4 [shape = 's32[2]{0}', space=sflag, size = 0x8, scoped, tag = 'scoped memory for tpu_custom_call.1']
    #allocation5 [shape = 'u8[26624]{0}', space=vmem, size = 0x6800, scoped, tag = 'input window, operand 1, single buffered']
    #allocation6 [shape = 's32[1]{0}', space=sflag, size = 0x4, scoped, tag = 'scoped memory for tpu_custom_call.1']
    #allocation7 [shape = 'u8[65536]{0}', space=vmem, size = 0x10000, scoped, tag = 'input window, operand 3, single buffered']
    #allocation8 [shape = 'u8[65536]{0}', space=vmem, size = 0x10000, scoped, tag = 'input window, operand 5, single buffered']
    #allocation9 [shape = 's32[1]{0}', space=sflag, size = 0x4, scoped, tag = 'scoped memory for tpu_custom_call.1']
    #allocation10 [shape = 'u8[32768]{0}', space=vmem, size = 0x8000, scoped, tag = 'input window, operand 7, single buffered']
    #allocation11 [shape = 'u8[16384]{0}', space=vmem, size = 0x4000, scoped, tag = 'output window, operand 0']
    %14 = vsyncpa [#allocation3], 0
    %s15 = scalar_lea.sflag [#allocation3], 1
    %16 = vsyncpa %s15, 0
    %17 = vsyncpa [#allocation6], 0
    %18 = vsyncpa [#allocation9], 0
    %19 = vsyncpa [#allocation4], 0
    %s20 = scalar_lea.sflag [#allocation4], 1
    %21 = vsyncpa %s20, 0
    loop: start=0, step=1, limit=4
    $region2: #{tpu_custom_call.1} parent=1 // loop_pre_header
      _
    $region3: #{tpu_custom_call.1} parent=1 // loop_header
      %s23 = sphi 0, %s27
      %p24 = scmp.ge.s32.totalorder %s23, 4
      %s33 = sphi 0, %s35
      %s36 = sphi 0, %s33
      %s37 = sphi 0, %s36
      %s53 = sphi 0, %s37
      %s57 = sphi 0, %s57
      %s59 = sphi 0, %s57
      %s60 = sphi 0, %s59
      %s74 = sphi 0, %s60
      %s78 = sphi 0, %s78
      %s80 = sphi 0, %s78
      %s81 = sphi 0, %s80
      %s95 = sphi 0, %s81
      %s99 = sphi 0, %s99
      %s101 = sphi 0, %s99
      %s102 = sphi 0, %s101
      %s116 = sphi 0, %s102
      %s120 = sphi 0, %s120
      %s122 = sphi 0, %s120
      %s123 = sphi 0, %s122
      %s137 = sphi 0, %s123
      %s141 = sphi 0, %s141
      %s143 = sphi 0, %s141
      %s144 = sphi 0, %s143
      %s158 = sphi 0, %s144
      %s162 = sphi 0, %s162
      %s164 = sphi 0, %s162
      %s165 = sphi 0, %s164
      %s179 = sphi 0, %s165
      %s183 = sphi 0, %s183
      %s185 = sphi 0, %s183
      %s186 = sphi 0, %s185
      %s200 = sphi 0, %s186
      %s204 = sphi 0, %s204
      %s206 = sphi 0, %s204
      %s207 = sphi 0, %s206
      %s221 = sphi 0, %s207
      %s227 = sphi 0, %s229
      %s230 = sphi 0, %s227
      %s231 = sphi 0, %s230
      %s247 = sphi 0, %s231
    $region4: #{tpu_custom_call.1} parent=1 // loop_header_branch
      %26 = sbr.rel (%p24) target = $region8
    $region5: #{tpu_custom_call.1} parent=1 // loop_body
      %s28 = ssub.s32 %s23, 1
      %s29 = ssub.s32 %s23, 2
      %s30 = sadd.s32 %s23, 1
      %s31 = ssub.s32 %s23, %s30
      %p32 = scmp.eq.s32.totalorder %s31, 0
      %s34 = sadd.s32 %s33, 1
      %s35 = scalar_select %p32, %s33, %s34
      %p38 = pneg %p32
      %p39 = scmp.eq.s32.totalorder %s23, 1
      %p40 = por %p38, %p39
      %p41 = scmp.ne.s32.totalorder %s33, %s36
      %p42 = scmp.eq.s32.totalorder %s23, 0
      %p43 = por %p41, %p42
      %p44 = scmp.ne.s32.totalorder %s33, %s36
      %p45 = scmp.eq.s32.totalorder %s28, 1
      %p46 = por %p44, %p45
      %p47 = scmp.ne.s32.totalorder %s36, %s37
      %p48 = scmp.eq.s32.totalorder %s28, 0
      %p49 = por %p47, %p48
      %p50 = scmp.ne.s32.totalorder %s36, %s37
      %p51 = scmp.eq.s32.totalorder %s29, 1
      %p52 = por %p50, %p51
      %p54 = scmp.ne.s32.totalorder %s37, %s53
      %p55 = scmp.eq.s32.totalorder %s29, 0
      %p56 = por %p54, %p55
      %s58 = sadd.s32 %s57, 1
      %p61 = scmp.eq.s32.totalorder %s23, 1
      %p62 = scmp.ne.s32.totalorder %s57, %s59
      %p63 = scmp.eq.s32.totalorder %s23, 0
      %p64 = por %p62, %p63
      %p65 = scmp.ne.s32.totalorder %s57, %s59
      %p66 = scmp.eq.s32.totalorder %s28, 1
      %p67 = por %p65, %p66
      %p68 = scmp.ne.s32.totalorder %s59, %s60
      %p69 = scmp.eq.s32.totalorder %s28, 0
      %p70 = por %p68, %p69
      %p71 = scmp.ne.s32.totalorder %s59, %s60
      %p72 = scmp.eq.s32.totalorder %s29, 1
      %p73 = por %p71, %p72
      %p75 = scmp.ne.s32.totalorder %s60, %s74
      %p76 = scmp.eq.s32.totalorder %s29, 0
      %p77 = por %p75, %p76
      %s79 = sadd.s32 %s78, 1
      %p82 = scmp.eq.s32.totalorder %s23, 1
      %p83 = scmp.ne.s32.totalorder %s78, %s80
      %p84 = scmp.eq.s32.totalorder %s23, 0
      %p85 = por %p83, %p84
      %p86 = scmp.ne.s32.totalorder %s78, %s80
      %p87 = scmp.eq.s32.totalorder %s28, 1
      %p88 = por %p86, %p87
      %p89 = scmp.ne.s32.totalorder %s80, %s81
      %p90 = scmp.eq.s32.totalorder %s28, 0
      %p91 = por %p89, %p90
      %p92 = scmp.ne.s32.totalorder %s80, %s81
      %p93 = scmp.eq.s32.totalorder %s29, 1
      %p94 = por %p92, %p93
      %p96 = scmp.ne.s32.totalorder %s81, %s95
      %p97 = scmp.eq.s32.totalorder %s29, 0
      %p98 = por %p96, %p97
      %s100 = sadd.s32 %s99, 1
      %p103 = scmp.eq.s32.totalorder %s23, 1
      %p104 = scmp.ne.s32.totalorder %s99, %s101
      %p105 = scmp.eq.s32.totalorder %s23, 0
      %p106 = por %p104, %p105
      %p107 = scmp.ne.s32.totalorder %s99, %s101
      %p108 = scmp.eq.s32.totalorder %s28, 1
      %p109 = por %p107, %p108
      %p110 = scmp.ne.s32.totalorder %s101, %s102
      %p111 = scmp.eq.s32.totalorder %s28, 0
      %p112 = por %p110, %p111
      %p113 = scmp.ne.s32.totalorder %s101, %s102
      %p114 = scmp.eq.s32.totalorder %s29, 1
      %p115 = por %p113, %p114
      %p117 = scmp.ne.s32.totalorder %s102, %s116
      %p118 = scmp.eq.s32.totalorder %s29, 0
      %p119 = por %p117, %p118
      %s121 = sadd.s32 %s120, 1
      %p124 = scmp.eq.s32.totalorder %s23, 1
      %p125 = scmp.ne.s32.totalorder %s120, %s122
      %p126 = scmp.eq.s32.totalorder %s23, 0
      %p127 = por %p125, %p126
      %p128 = scmp.ne.s32.totalorder %s120, %s122
      %p129 = scmp.eq.s32.totalorder %s28, 1
      %p130 = por %p128, %p129
      %p131 = scmp.ne.s32.totalorder %s122, %s123
      %p132 = scmp.eq.s32.totalorder %s28, 0
      %p133 = por %p131, %p132
      %p134 = scmp.ne.s32.totalorder %s122, %s123
      %p135 = scmp.eq.s32.totalorder %s29, 1
      %p136 = por %p134, %p135
      %p138 = scmp.ne.s32.totalorder %s123, %s137
      %p139 = scmp.eq.s32.totalorder %s29, 0
      %p140 = por %p138, %p139
      %s142 = sadd.s32 %s141, 1
      %p145 = scmp.eq.s32.totalorder %s23, 1
      %p146 = scmp.ne.s32.totalorder %s141, %s143
      %p147 = scmp.eq.s32.totalorder %s23, 0
      %p148 = por %p146, %p147
      %p149 = scmp.ne.s32.totalorder %s141, %s143
      %p150 = scmp.eq.s32.totalorder %s28, 1
      %p151 = por %p149, %p150
      %p152 = scmp.ne.s32.totalorder %s143, %s144
      %p153 = scmp.eq.s32.totalorder %s28, 0
      %p154 = por %p152, %p153
      %p155 = scmp.ne.s32.totalorder %s143, %s144
      %p156 = scmp.eq.s32.totalorder %s29, 1
      %p157 = por %p155, %p156
      %p159 = scmp.ne.s32.totalorder %s144, %s158
      %p160 = scmp.eq.s32.totalorder %s29, 0
      %p161 = por %p159, %p160
      %s163 = sadd.s32 %s162, 1
      %p166 = scmp.eq.s32.totalorder %s23, 1
      %p167 = scmp.ne.s32.totalorder %s162, %s164
      %p168 = scmp.eq.s32.totalorder %s23, 0
      %p169 = por %p167, %p168
      %p170 = scmp.ne.s32.totalorder %s162, %s164
      %p171 = scmp.eq.s32.totalorder %s28, 1
      %p172 = por %p170, %p171
      %p173 = scmp.ne.s32.totalorder %s164, %s165
      %p174 = scmp.eq.s32.totalorder %s28, 0
      %p175 = por %p173, %p174
      %p176 = scmp.ne.s32.totalorder %s164, %s165
      %p177 = scmp.eq.s32.totalorder %s29, 1
      %p178 = por %p176, %p177
      %p180 = scmp.ne.s32.totalorder %s165, %s179
      %p181 = scmp.eq.s32.totalorder %s29, 0
      %p182 = por %p180, %p181
      %s184 = sadd.s32 %s183, 1
      %p187 = scmp.eq.s32.totalorder %s23, 1
      %p188 = scmp.ne.s32.totalorder %s183, %s185
      %p189 = scmp.eq.s32.totalorder %s23, 0
      %p190 = por %p188, %p189
      %p191 = scmp.ne.s32.totalorder %s183, %s185
      %p192 = scmp.eq.s32.totalorder %s28, 1
      %p193 = por %p191, %p192
      %p194 = scmp.ne.s32.totalorder %s185, %s186
      %p195 = scmp.eq.s32.totalorder %s28, 0
      %p196 = por %p194, %p195
      %p197 = scmp.ne.s32.totalorder %s185, %s186
      %p198 = scmp.eq.s32.totalorder %s29, 1
      %p199 = por %p197, %p198
      %p201 = scmp.ne.s32.totalorder %s186, %s200
      %p202 = scmp.eq.s32.totalorder %s29, 0
      %p203 = por %p201, %p202
      %s205 = sadd.s32 %s204, 1
      %p208 = scmp.eq.s32.totalorder %s23, 1
      %p209 = scmp.ne.s32.totalorder %s204, %s206
      %p210 = scmp.eq.s32.totalorder %s23, 0
      %p211 = por %p209, %p210
      %p212 = scmp.ne.s32.totalorder %s204, %s206
      %p213 = scmp.eq.s32.totalorder %s28, 1
      %p214 = por %p212, %p213
      %p215 = scmp.ne.s32.totalorder %s206, %s207
      %p216 = scmp.eq.s32.totalorder %s28, 0
      %p217 = por %p215, %p216
      %p218 = scmp.ne.s32.totalorder %s206, %s207
      %p219 = scmp.eq.s32.totalorder %s29, 1
      %p220 = por %p218, %p219
      %p222 = scmp.ne.s32.totalorder %s207, %s221
      %p223 = scmp.eq.s32.totalorder %s29, 0
      %p224 = por %p222, %p223
      %s225 = ssub.s32 %s23, %s30
      %p226 = scmp.eq.s32.totalorder %s225, 0
      %s228 = sadd.s32 %s227, 1
      %s229 = scalar_select %p226, %s227, %s228
      %p232 = pneg %p226
      %p233 = scmp.eq.s32.totalorder %s23, 1
      %p234 = por %p232, %p233
      %p235 = scmp.ne.s32.totalorder %s227, %s230
      %p236 = scmp.eq.s32.totalorder %s23, 0
      %p237 = por %p235, %p236
      %p238 = scmp.ne.s32.totalorder %s227, %s230
      %p239 = scmp.eq.s32.totalorder %s28, 1
      %p240 = por %p238, %p239
      %p241 = scmp.ne.s32.totalorder %s230, %s231
      %p242 = scmp.eq.s32.totalorder %s28, 0
      %p243 = por %p241, %p242
      %p244 = scmp.ne.s32.totalorder %s230, %s231
      %p245 = scmp.eq.s32.totalorder %s29, 1
      %p246 = por %p244, %p245
      %p248 = scmp.ne.s32.totalorder %s231, %s247
      %p249 = scmp.eq.s32.totalorder %s29, 0
      %p250 = por %p248, %p249
      %p251 = scmp.le.s32.totalorder 1, %s23
      %p252 = scmp.lt.s32.totalorder %s23, 3
      %p253 = pnand %p251, %p252
      %p254 = pneg %p253
      // Predicated region
      $region9: #{tpu_custom_call.1} parent=5 // pred_check
        _
      $region10: #{tpu_custom_call.1} parent=5 // pred_check_branch
        %256 = sbr.rel (%p253) target = $region12
      $region11: #{tpu_custom_call.1} parent=5 // pred_region
        %s257 = ssub.s32 %s23, 1
        // Predicated region
        $region13: #{tpu_custom_call.1} parent=11 // pred_check
          %p258 = pneg %p70
        $region14: #{tpu_custom_call.1} parent=11 // pred_check_branch
          %260 = sbr.rel (%p258) target = $region16
        $region15: #{tpu_custom_call.1} parent=11 // pred_region
          %s262 = ssub.s32 832, 832
          %263 = vsyncadd [#allocation6], %s262
          %s264 = sshll.u32 [#allocation5], 4
          %s265 = int_to_ptr.vmem [resolvable:$true] %s264
          %270 = dma.hbm_to_vmem [thread:$0]  %s1, 832, %s265, [#allocation6], 64, 64, 4
        $region16: #{tpu_custom_call.1} parent=11 // pred_fallthru
          _
        // Predicated region
        $region17: #{tpu_custom_call.1} parent=11 // pred_check
          %p271 = pneg %p91
        $region18: #{tpu_custom_call.1} parent=11 // pred_check_branch
          %273 = sbr.rel (%p271) target = $region20
        $region19: #{tpu_custom_call.1} parent=11 // pred_region
          _
        $region20: #{tpu_custom_call.1} parent=11 // pred_fallthru
          _
        // Predicated region
        $region21: #{tpu_custom_call.1} parent=11 // pred_check
          %p274 = pneg %p112
        $region22: #{tpu_custom_call.1} parent=11 // pred_check_branch
          %276 = sbr.rel (%p274) target = $region24
        $region23: #{tpu_custom_call.1} parent=11 // pred_region
          %s278 = ssub.s32 2048, 2048
          %279 = vsyncadd [#allocation6], %s278
          %s280 = sshll.u32 [#allocation7], 4
          %s281 = int_to_ptr.vmem [resolvable:$true] %s280
          %286 = dma.hbm_to_vmem [thread:$0]  %s3, 2048, %s281, [#allocation6], 128, 128, 8
        $region24: #{tpu_custom_call.1} parent=11 // pred_fallthru
          _
        // Predicated region
        $region25: #{tpu_custom_call.1} parent=11 // pred_check
          %p287 = pneg %p133
        $region26: #{tpu_custom_call.1} parent=11 // pred_check_branch
          %289 = sbr.rel (%p287) target = $region28
        $region27: #{tpu_custom_call.1} parent=11 // pred_region
          _
        $region28: #{tpu_custom_call.1} parent=11 // pred_fallthru
          _
        // Predicated region
        $region29: #{tpu_custom_call.1} parent=11 // pred_check
          %p290 = pneg %p154
        $region30: #{tpu_custom_call.1} parent=11 // pred_check_branch
          %292 = sbr.rel (%p290) target = $region32
        $region31: #{tpu_custom_call.1} parent=11 // pred_region
          %s294 = ssub.s32 2048, 2048
          %295 = vsyncadd [#allocation9], %s294
          %s296 = sshll.u32 [#allocation8], 4
          %s297 = int_to_ptr.vmem [resolvable:$true] %s296
          %302 = dma.hbm_to_vmem [thread:$0]  %s5, 2048, %s297, [#allocation9], 64, 64, 4
        $region32: #{tpu_custom_call.1} parent=11 // pred_fallthru
          _
        // Predicated region
        $region33: #{tpu_custom_call.1} parent=11 // pred_check
          %p303 = pneg %p175
        $region34: #{tpu_custom_call.1} parent=11 // pred_check_branch
          %305 = sbr.rel (%p303) target = $region36
        $region35: #{tpu_custom_call.1} parent=11 // pred_region
          _
        $region36: #{tpu_custom_call.1} parent=11 // pred_fallthru
          _
        // Predicated region
        $region37: #{tpu_custom_call.1} parent=11 // pred_check
          %p306 = pneg %p196
        $region38: #{tpu_custom_call.1} parent=11 // pred_check_branch
          %308 = sbr.rel (%p306) target = $region40
        $region39: #{tpu_custom_call.1} parent=11 // pred_region
          %s310 = ssub.s32 1024, 1024
          %311 = vsyncadd [#allocation9], %s310
          %s312 = sshll.u32 [#allocation10], 4
          %s313 = int_to_ptr.vmem [resolvable:$true] %s312
          %318 = dma.hbm_to_vmem [thread:$0]  %s7, 1024, %s313, [#allocation9], 64, 64, 4
        $region40: #{tpu_custom_call.1} parent=11 // pred_fallthru
          _
        // Predicated region
        $region41: #{tpu_custom_call.1} parent=11 // pred_check
          %p319 = pneg %p217
        $region42: #{tpu_custom_call.1} parent=11 // pred_check_branch
          %321 = sbr.rel (%p319) target = $region44
        $region43: #{tpu_custom_call.1} parent=11 // pred_region
          _
        $region44: #{tpu_custom_call.1} parent=11 // pred_fallthru
          _
      $region12: #{tpu_custom_call.1} parent=5 // pred_fallthru
        _
      %p322 = scmp.lt.s32.totalorder %s23, 2
      // Predicated region
      $region45: #{tpu_custom_call.1} parent=5 // pred_check
        %p323 = pneg %p322
      $region46: #{tpu_custom_call.1} parent=5 // pred_check_branch
        %325 = sbr.rel (%p323) target = $region48
      $region47: #{tpu_custom_call.1} parent=5 // pred_region
        // Predicated region
        $region49: #{tpu_custom_call.1} parent=47 // pred_check
          %p326 = pneg %p43
        $region50: #{tpu_custom_call.1} parent=47 // pred_check_branch
          %328 = sbr.rel (%p326) target = $region52
        $region51: #{tpu_custom_call.1} parent=47 // pred_region
          %s329 = sand.u32 %s33, 1
          %s330 = scalar_lea.sflag [#allocation3], %s329
          %s331 = sand.u32 %s33, 1
          %s332 = smul.addr %s331, 32
          %s333 = scalar_lea.vmem [#allocation2], %s332
          %s334 = smul.u32 4, %s23
          %s335 = ssub.s32 5, %s334
          %p336 = scmp.lt.s32.totalorder %s335, 4
          %s337 = scalar_select %p336, %s335, 4
          %s338 = smul.u32 128, %s337
          %s340 = ssub.s32 512, %s338
          %341 = vsyncadd %s330, %s340
          %p342 = scmp.ne.s32.totalorder 0, %s338
          %s343 = smul.addr %s334, 128
          %s344 = scalar_lea.hbm %s0, %s343
          %s345 = smul.u32 8, %s337
          %s346 = sshll.u32 %s333, 4
          %s347 = int_to_ptr.vmem [resolvable:$true] %s346
          %s348 = sshll.u32 %s345, 4
          %352 = dma.hbm_to_vmem [thread:$0]  (%p342), %s344, %s348, %s347, %s330, 128, 128, 8
        $region52: #{tpu_custom_call.1} parent=47 // pred_fallthru
          _
      $region48: #{tpu_custom_call.1} parent=5 // pred_fallthru
        _
      %p353 = scmp.le.s32.totalorder 1, %s23
      %p354 = scmp.lt.s32.totalorder %s23, 3
      %p355 = pnand %p353, %p354
      %p356 = pneg %p355
      // Predicated region
      $region53: #{tpu_custom_call.1} parent=5 // pred_check
        _
      $region54: #{tpu_custom_call.1} parent=5 // pred_check_branch
        %358 = sbr.rel (%p355) target = $region56
      $region55: #{tpu_custom_call.1} parent=5 // pred_region
        %s359 = ssub.s32 %s23, 1
        %s360 = sand.u32 %s36, 1
        %s361 = scalar_lea.sflag [#allocation3], %s360
        %s362 = sand.u32 %s36, 1
        %s363 = smul.addr %s362, 32
        %s364 = scalar_lea.vmem [#allocation2], %s363
        // Predicated region
        $region57: #{tpu_custom_call.1} parent=55 // pred_check
          %p365 = pneg %p49
        $region58: #{tpu_custom_call.1} parent=55 // pred_check_branch
          %367 = sbr.rel (%p365) target = $region60
        $region59: #{tpu_custom_call.1} parent=55 // pred_region
          %368 = dma.done %s361, 512
        $region60: #{tpu_custom_call.1} parent=55 // pred_fallthru
          _
        // Predicated region
        $region61: #{tpu_custom_call.1} parent=55 // pred_check
          %p369 = pneg %p70
        $region62: #{tpu_custom_call.1} parent=55 // pred_check_branch
          %371 = sbr.rel (%p369) target = $region64
        $region63: #{tpu_custom_call.1} parent=55 // pred_region
          %372 = dma.done [#allocation6], 832
        $region64: #{tpu_custom_call.1} parent=55 // pred_fallthru
          _
        // Predicated region
        $region65: #{tpu_custom_call.1} parent=55 // pred_check
          %p373 = pneg %p112
        $region66: #{tpu_custom_call.1} parent=55 // pred_check_branch
          %375 = sbr.rel (%p373) target = $region68
        $region67: #{tpu_custom_call.1} parent=55 // pred_region
          %376 = dma.done [#allocation6], 2048
        $region68: #{tpu_custom_call.1} parent=55 // pred_fallthru
          _
        // Predicated region
        $region69: #{tpu_custom_call.1} parent=55 // pred_check
          %p377 = pneg %p154
        $region70: #{tpu_custom_call.1} parent=55 // pred_check_branch
          %379 = sbr.rel (%p377) target = $region72
        $region71: #{tpu_custom_call.1} parent=55 // pred_region
          %380 = dma.done [#allocation9], 2048
        $region72: #{tpu_custom_call.1} parent=55 // pred_fallthru
          _
        // Predicated region
        $region73: #{tpu_custom_call.1} parent=55 // pred_check
          %p381 = pneg %p196
        $region74: #{tpu_custom_call.1} parent=55 // pred_check_branch
          %383 = sbr.rel (%p381) target = $region76
        $region75: #{tpu_custom_call.1} parent=55 // pred_region
          %384 = dma.done [#allocation9], 1024
        $region76: #{tpu_custom_call.1} parent=55 // pred_fallthru
          _
        %s385 = sand.u32 %s36, 1
        %s386 = scalar_lea.sflag [#allocation3], %s385
        %s387 = sand.u32 %s36, 1
        %s388 = smul.addr %s387, 32
        %s389 = scalar_lea.vmem [#allocation2], %s388
        %p390 = pneg %p49
        %p391 = pneg %p46
        %p392 = pneg %p70
        %p393 = pneg %p67
        %p394 = pneg %p91
        %p395 = pneg %p88
        %p396 = pneg %p112
        %p397 = pneg %p109
        %p398 = pneg %p133
        %p399 = pneg %p130
        %p400 = pneg %p154
        %p401 = pneg %p151
        %p402 = pneg %p175
        %p403 = pneg %p172
        %p404 = pneg %p196
        %p405 = pneg %p193
        %p406 = pneg %p217
        %p407 = pneg %p214
        %p408 = pneg %p243
        %p409 = pneg %p240
        %s410 = sand.u32 %s230, 1
        %s411 = scalar_lea.sflag [#allocation4], %s410
        %s412 = sand.u32 %s230, 1
        %s413 = smul.addr %s412, 16
        %s414 = scalar_lea.vmem [#allocation11], %s413
        %s415 = smul.u32 4, %s28
        %s416 = ssub.s32 5, %s415
        %p417 = scmp.lt.s32.totalorder %s416, 4
        %s418 = scalar_select %p417, %s416, 4
        %s419 = smul.u32 128, %s418
        %s420 = smul.u32 4, %s28
        %s421 = ssub.s32 5, %s420
        %p422 = scmp.lt.s32.totalorder %s421, 4
        %s423 = scalar_select %p422, %s421, 4
        %s424 = smul.u32 64, %s423
        %v426 = vld [vmem:[%s364] sm:$0xff]
        %v427 = vld [vmem:[%s364 + $0x8] sm:$0xff]
        %v428 = vld [vmem:[%s364 + $0x10] sm:$0xff]
        %v429 = vld [vmem:[%s364 + $0x18] sm:$0xff]
        %v430 = vpack.c.bf16 %v427, %v426
        %v431 = vpack.c.bf16 %v429, %v428
        %v432 = vld [vmem:[#allocation5] sm:$0xf]
        %v433 = vld [vmem:[#allocation5 + $0x4] sm:$0xf]
        %v434 = vld [vmem:[#allocation5 + $0x8] sm:$0xf]
        %v435 = vld [vmem:[#allocation5 + $0xc] sm:$0xf]
        %v436 = vld [vmem:[#allocation5 + $0x10] sm:$0xf]
        %v437 = vld [vmem:[#allocation5 + $0x14] sm:$0xf]
        %v438 = vld [vmem:[#allocation5 + $0x18] sm:$0xf]
        %v439 = vld [vmem:[#allocation5 + $0x1c] sm:$0xf]
        %v440 = vld [vmem:[#allocation5 + $0x20] sm:$0xf]
        %v441 = vld [vmem:[#allocation5 + $0x24] sm:$0xf]
        %v442 = vld [vmem:[#allocation5 + $0x28] sm:$0xf]
        %v443 = vld [vmem:[#allocation5 + $0x2c] sm:$0xf]
        %v444 = vld [vmem:[#allocation5 + $0x30] sm:$0x3]
        %v445 = vld [vmem:[%s2] sm:$0x1]
        %v447 = vlaneseq
        %v448 = vshrl.u32 %v447, 7
        %v449 = vsub.s32 0, %v448
        %v450 = vrot.slane %v445, %v449
        %v465 = vunpack.c.l.b16 %v432
        %v466 = vunpack.c.l.b16 %v433
        %v467 = vunpack.c.l.b16 %v434
        %v468 = vunpack.c.l.b16 %v435
        %v469 = vunpack.c.l.b16 %v436
        %v470 = vunpack.c.l.b16 %v437
        %v471 = vunpack.c.l.b16 %v438
        %v472 = vunpack.c.l.b16 %v439
        %v473 = vunpack.c.l.b16 %v440
        %v474 = vunpack.c.l.b16 %v441
        %v475 = vunpack.c.l.b16 %v442
        %v476 = vunpack.c.l.b16 %v443
        %v477 = vunpack.c.l.b16 %v444
        %v478 = vpack.c.b16 %v466, %v465
        %v479 = vpack.c.b16 %v468, %v467
        %v480 = vpack.c.b16 %v470, %v469
        %v481 = vpack.c.b16 %v472, %v471
        %v482 = vpack.c.b16 %v474, %v473
        %v483 = vpack.c.b16 %v476, %v475
        %v484 = vpack.c.b16 %v477, %v477
        %vm491 = vcmask 809984
        %v493 = vsel %vm491, %v430, 0
        %v496 = vsel %vm491, %v431, 0
        %vm498 = vcmask 1040384
        %vm499 = vcmask 1041408
        %v500 = vsel %vm498, 4294967295, 65535
        %v501 = vsel %vm499, %v500, 0
        %v503 = vand.u32 %v484, %v501
        %505 = vmatprep.subr.bf16.mxu0 0
        %506 = vmatpush1.bf16.msra.mxu0 %v478
        %507 = vmatprep.subr.bf16.mxu0 0
        %508 = vmatpush1.bf16.msra.mxu0 %v479
        %509 = vmatprep.subr.bf16.mxu0 0
        %510 = vmatpush1.bf16.msra.mxu0 %v480
        %511 = vmatprep.subr.bf16.mxu0 0
        %512 = vmatpush1.bf16.msra.mxu0 %v481
        %513 = vmatprep.subr.bf16.mxu0 0
        %514 = vmatpush1.bf16.msra.mxu0 %v482
        %515 = vmatprep.subr.bf16.mxu0 0
        %516 = vmatpush1.bf16.msra.mxu0 %v483
        %517 = vmatprep.subr.bf16.mxu0 0
        %518 = vmatpush1.bf16.msra.mxu0 %v503
        %519 = vmatprep.subr.bf16.mxu0 0
        %520 = vmatpush1.bf16.msra.mxu0 0
        %521 = vmatprep.subr.bf16.mxu0 0
        %522 = vmatpush1.bf16.msra.mxu0 0
        %523 = vmatprep.subr.bf16.mxu0 0
        %524 = vmatpush1.bf16.msra.mxu0 0
        %525 = vmatprep.subr.bf16.mxu0 0
        %526 = vmatpush1.bf16.msra.mxu0 0
        %527 = vmatprep.subr.bf16.mxu0 0
        %528 = vmatpush1.bf16.msra.mxu0 0
        %529 = vmatprep.subr.bf16.mxu0 0
        %530 = vmatpush1.bf16.msra.mxu0 0
        %531 = vmatprep.subr.bf16.mxu0 0
        %532 = vmatpush1.bf16.msra.mxu0 0
        %533 = vmatprep.subr.bf16.mxu0 0
        %534 = vmatpush1.bf16.msra.mxu0 0
        %535 = vmatprep.subr.bf16.mxu0 0
        %536 = vmatpush1.bf16.msra.mxu0 0
        %537 = vmatprep.mubr.bf16.mxu0 0
        %538 = vmatmul.mubr.bf16.gmra.mrb[0].mxu0 %v493
        %v539 = vpop.f32.mrb[0].mxu0
        %v540 = vadd.f32 %v450, %v539
        %v541 = vpop.f32.mrb[0].mxu0
        %v542 = vpop.f32.mrb[0].mxu0
        %v543 = vadd.f32 %v450, %v542
        %v544 = vpop.f32.mrb[0].mxu0
        %545 = vmatprep.mubr.bf16.mxu0 0
        %546 = vmatmul.mubr.bf16.gmra.mrb[0].mxu0 %v496
        %v547 = vpop.f32.mrb[0].mxu0
        %v548 = vadd.f32 %v450, %v547
        %v549 = vpop.f32.mrb[0].mxu0
        %v550 = vpop.f32.mrb[0].mxu0
        %v551 = vadd.f32 %v450, %v550
        %v552 = vpop.f32.mrb[0].mxu0
        %553 = vdwg.mxu0
        %v554 = vmax.f32 %v540, 0.0
        %v555 = vmax.f32 %v543, 0.0
        %v556 = vmax.f32 %v548, 0.0
        %v557 = vmax.f32 %v551, 0.0
        %v558 = vpack.c.bf16 %v555, %v554
        %v559 = vpack.c.bf16 %v557, %v556
        %v560 = vld [vmem:[#allocation7] sm:$0xff]
        %v561 = vld [vmem:[#allocation7 + $0x8] sm:$0xff]
        %v562 = vld [vmem:[#allocation7 + $0x10] sm:$0xff]
        %v563 = vld [vmem:[#allocation7 + $0x18] sm:$0xff]
        %v564 = vld [vmem:[#allocation7 + $0x20] sm:$0xff]
        %v565 = vld [vmem:[#allocation7 + $0x28] sm:$0xff]
        %v566 = vld [vmem:[#allocation7 + $0x30] sm:$0xff]
        %v567 = vld [vmem:[#allocation7 + $0x38] sm:$0xff]
        %v568 = vld [vmem:[#allocation7 + $0x40] sm:$0xff]
        %v569 = vld [vmem:[#allocation7 + $0x48] sm:$0xff]
        %v570 = vld [vmem:[#allocation7 + $0x50] sm:$0xff]
        %v571 = vld [vmem:[#allocation7 + $0x58] sm:$0xff]
        %v572 = vld [vmem:[#allocation7 + $0x60] sm:$0xff]
        %v573 = vld [vmem:[#allocation7 + $0x68] sm:$0xff]
        %v574 = vld [vmem:[#allocation7 + $0x70] sm:$0xff]
        %v575 = vld [vmem:[#allocation7 + $0x78] sm:$0xff]
        %v576 = vld [vmem:[%s4] sm:$0x3]
        %v578 = vlaneseq
        %v579 = vshrl.u32 %v578, 7
        %v580 = vsub.s32 0, %v579
        %v581 = vrot.slane %v576, %v580
        %v582 = vlaneseq
        %v583 = vshrl.u32 %v582, 7
        %v584 = vsub.s32 1, %v583
        %v585 = vrot.slane %v576, %v584
        %v604 = vunpack.c.l.b16 %v560
        %v605 = vunpack.c.h.b16 %v560
        %v606 = vunpack.c.l.b16 %v561
        %v607 = vunpack.c.h.b16 %v561
        %v608 = vunpack.c.l.b16 %v562
        %v609 = vunpack.c.h.b16 %v562
        %v610 = vunpack.c.l.b16 %v563
        %v611 = vunpack.c.h.b16 %v563
        %v612 = vunpack.c.l.b16 %v564
        %v613 = vunpack.c.h.b16 %v564
        %v614 = vunpack.c.l.b16 %v565
        %v615 = vunpack.c.h.b16 %v565
        %v616 = vunpack.c.l.b16 %v566
        %v617 = vunpack.c.h.b16 %v566
        %v618 = vunpack.c.l.b16 %v567
        %v619 = vunpack.c.h.b16 %v567
        %v620 = vunpack.c.l.b16 %v568
        %v621 = vunpack.c.h.b16 %v568
        %v622 = vunpack.c.l.b16 %v569
        %v623 = vunpack.c.h.b16 %v569
        %v624 = vunpack.c.l.b16 %v570
        %v625 = vunpack.c.h.b16 %v570
        %v626 = vunpack.c.l.b16 %v571
        %v627 = vunpack.c.h.b16 %v571
        %v628 = vunpack.c.l.b16 %v572
        %v629 = vunpack.c.h.b16 %v572
        %v630 = vunpack.c.l.b16 %v573
        %v631 = vunpack.c.h.b16 %v573
        %v632 = vunpack.c.l.b16 %v574
        %v633 = vunpack.c.h.b16 %v574
        %v634 = vunpack.c.l.b16 %v575
        %v635 = vunpack.c.h.b16 %v575
        %v636 = vpack.c.b16 %v606, %v604
        %v637 = vpack.c.b16 %v607, %v605
        %v638 = vpack.c.b16 %v610, %v608
        %v639 = vpack.c.b16 %v611, %v609
        %v640 = vpack.c.b16 %v614, %v612
        %v641 = vpack.c.b16 %v615, %v613
        %v642 = vpack.c.b16 %v618, %v616
        %v643 = vpack.c.b16 %v619, %v617
        %v644 = vpack.c.b16 %v622, %v620
        %v645 = vpack.c.b16 %v623, %v621
        %v646 = vpack.c.b16 %v626, %v624
        %v647 = vpack.c.b16 %v627, %v625
        %v648 = vpack.c.b16 %v630, %v628
        %v649 = vpack.c.b16 %v631, %v629
        %v650 = vpack.c.b16 %v634, %v632
        %v651 = vpack.c.b16 %v635, %v633
        %668 = vmatprep.subr.bf16.mxu0 %v637
        %669 = vmatpush1.bf16.msra.mxu0 %v636
        %670 = vmatprep.subr.bf16.mxu0 %v639
        %671 = vmatpush1.bf16.msra.mxu0 %v638
        %672 = vmatprep.subr.bf16.mxu0 %v641
        %673 = vmatpush1.bf16.msra.mxu0 %v640
        %674 = vmatprep.subr.bf16.mxu0 %v643
        %675 = vmatpush1.bf16.msra.mxu0 %v642
        %676 = vmatprep.subr.bf16.mxu0 %v645
        %677 = vmatpush1.bf16.msra.mxu0 %v644
        %678 = vmatprep.subr.bf16.mxu0 %v647
        %679 = vmatpush1.bf16.msra.mxu0 %v646
        %680 = vmatprep.subr.bf16.mxu0 %v649
        %681 = vmatpush1.bf16.msra.mxu0 %v648
        %682 = vmatprep.subr.bf16.mxu0 %v651
        %683 = vmatpush1.bf16.msra.mxu0 %v650
        %684 = vmatprep.subr.bf16.mxu0 0
        %685 = vmatpush1.bf16.msra.mxu0 0
        %686 = vmatprep.subr.bf16.mxu0 0
        %687 = vmatpush1.bf16.msra.mxu0 0
        %688 = vmatprep.subr.bf16.mxu0 0
        %689 = vmatpush1.bf16.msra.mxu0 0
        %690 = vmatprep.subr.bf16.mxu0 0
        %691 = vmatpush1.bf16.msra.mxu0 0
        %692 = vmatprep.subr.bf16.mxu0 0
        %693 = vmatpush1.bf16.msra.mxu0 0
        %694 = vmatprep.subr.bf16.mxu0 0
        %695 = vmatpush1.bf16.msra.mxu0 0
        %696 = vmatprep.subr.bf16.mxu0 0
        %697 = vmatpush1.bf16.msra.mxu0 0
        %698 = vmatprep.subr.bf16.mxu0 0
        %699 = vmatpush1.bf16.msra.mxu0 0
        %700 = vmatprep.mubr.bf16.mxu0 0
        %701 = vmatmul.mubr.bf16.gmra.mrb[0].mxu0 %v558
        %v702 = vpop.f32.mrb[0].mxu0
        %v703 = vadd.f32 %v581, %v702
        %v704 = vpop.f32.mrb[0].mxu0
        %v705 = vadd.f32 %v585, %v704
        %v706 = vpop.f32.mrb[0].mxu0
        %v707 = vadd.f32 %v581, %v706
        %v708 = vpop.f32.mrb[0].mxu0
        %v709 = vadd.f32 %v585, %v708
        %710 = vmatprep.mubr.bf16.mxu0 0
        %711 = vmatmul.mubr.bf16.gmra.mrb[0].mxu0 %v559
        %v712 = vpop.f32.mrb[0].mxu0
        %v713 = vadd.f32 %v581, %v712
        %v714 = vpop.f32.mrb[0].mxu0
        %v715 = vadd.f32 %v585, %v714
        %v716 = vpop.f32.mrb[0].mxu0
        %v717 = vadd.f32 %v581, %v716
        %v718 = vpop.f32.mrb[0].mxu0
        %v719 = vadd.f32 %v585, %v718
        %720 = vdwg.mxu0
        %v721 = vmax.f32 %v703, 0.0
        %v722 = vmax.f32 %v705, 0.0
        %v723 = vmax.f32 %v707, 0.0
        %v724 = vmax.f32 %v709, 0.0
        %v725 = vmax.f32 %v713, 0.0
        %v726 = vmax.f32 %v715, 0.0
        %v727 = vmax.f32 %v717, 0.0
        %v728 = vmax.f32 %v719, 0.0
        %v729 = vpack.c.bf16 %v723, %v721
        %v730 = vpack.c.bf16 %v724, %v722
        %v731 = vpack.c.bf16 %v727, %v725
        %v732 = vpack.c.bf16 %v728, %v726
        %v733 = vld [vmem:[#allocation8] sm:$0xf]
        %v734 = vld [vmem:[#allocation8 + $0x4] sm:$0xf]
        %v735 = vld [vmem:[#allocation8 + $0x8] sm:$0xf]
        %v736 = vld [vmem:[#allocation8 + $0xc] sm:$0xf]
        %v737 = vld [vmem:[#allocation8 + $0x10] sm:$0xf]
        %v738 = vld [vmem:[#allocation8 + $0x14] sm:$0xf]
        %v739 = vld [vmem:[#allocation8 + $0x18] sm:$0xf]
        %v740 = vld [vmem:[#allocation8 + $0x1c] sm:$0xf]
        %v741 = vld [vmem:[#allocation8 + $0x20] sm:$0xf]
        %v742 = vld [vmem:[#allocation8 + $0x24] sm:$0xf]
        %v743 = vld [vmem:[#allocation8 + $0x28] sm:$0xf]
        %v744 = vld [vmem:[#allocation8 + $0x2c] sm:$0xf]
        %v745 = vld [vmem:[#allocation8 + $0x30] sm:$0xf]
        %v746 = vld [vmem:[#allocation8 + $0x34] sm:$0xf]
        %v747 = vld [vmem:[#allocation8 + $0x38] sm:$0xf]
        %v748 = vld [vmem:[#allocation8 + $0x3c] sm:$0xf]
        %v749 = vld [vmem:[#allocation8 + $0x40] sm:$0xf]
        %v750 = vld [vmem:[#allocation8 + $0x44] sm:$0xf]
        %v751 = vld [vmem:[#allocation8 + $0x48] sm:$0xf]
        %v752 = vld [vmem:[#allocation8 + $0x4c] sm:$0xf]
        %v753 = vld [vmem:[#allocation8 + $0x50] sm:$0xf]
        %v754 = vld [vmem:[#allocation8 + $0x54] sm:$0xf]
        %v755 = vld [vmem:[#allocation8 + $0x58] sm:$0xf]
        %v756 = vld [vmem:[#allocation8 + $0x5c] sm:$0xf]
        %v757 = vld [vmem:[#allocation8 + $0x60] sm:$0xf]
        %v758 = vld [vmem:[#allocation8 + $0x64] sm:$0xf]
        %v759 = vld [vmem:[#allocation8 + $0x68] sm:$0xf]
        %v760 = vld [vmem:[#allocation8 + $0x6c] sm:$0xf]
        %v761 = vld [vmem:[#allocation8 + $0x70] sm:$0xf]
        %v762 = vld [vmem:[#allocation8 + $0x74] sm:$0xf]
        %v763 = vld [vmem:[#allocation8 + $0x78] sm:$0xf]
        %v764 = vld [vmem:[#allocation8 + $0x7c] sm:$0xf]
        %v765 = vld [vmem:[%s6] sm:$0x1]
        %v767 = vlaneseq
        %v768 = vshrl.u32 %v767, 7
        %v769 = vsub.s32 0, %v768
        %v770 = vrot.slane %v765, %v769
        %v804 = vunpack.c.l.b16 %v733
        %v805 = vunpack.c.l.b16 %v734
        %v806 = vunpack.c.l.b16 %v735
        %v807 = vunpack.c.l.b16 %v736
        %v808 = vunpack.c.l.b16 %v737
        %v809 = vunpack.c.l.b16 %v738
        %v810 = vunpack.c.l.b16 %v739
        %v811 = vunpack.c.l.b16 %v740
        %v812 = vunpack.c.l.b16 %v741
        %v813 = vunpack.c.l.b16 %v742
        %v814 = vunpack.c.l.b16 %v743
        %v815 = vunpack.c.l.b16 %v744
        %v816 = vunpack.c.l.b16 %v745
        %v817 = vunpack.c.l.b16 %v746
        %v818 = vunpack.c.l.b16 %v747
        %v819 = vunpack.c.l.b16 %v748
        %v820 = vunpack.c.l.b16 %v749
        %v821 = vunpack.c.l.b16 %v750
        %v822 = vunpack.c.l.b16 %v751
        %v823 = vunpack.c.l.b16 %v752
        %v824 = vunpack.c.l.b16 %v753
        %v825 = vunpack.c.l.b16 %v754
        %v826 = vunpack.c.l.b16 %v755
        %v827 = vunpack.c.l.b16 %v756
        %v828 = vunpack.c.l.b16 %v757
        %v829 = vunpack.c.l.b16 %v758
        %v830 = vunpack.c.l.b16 %v759
        %v831 = vunpack.c.l.b16 %v760
        %v832 = vunpack.c.l.b16 %v761
        %v833 = vunpack.c.l.b16 %v762
        %v834 = vunpack.c.l.b16 %v763
        %v835 = vunpack.c.l.b16 %v764
        %v836 = vpack.c.b16 %v805, %v804
        %v837 = vpack.c.b16 %v807, %v806
        %v838 = vpack.c.b16 %v809, %v808
        %v839 = vpack.c.b16 %v811, %v810
        %v840 = vpack.c.b16 %v813, %v812
        %v841 = vpack.c.b16 %v815, %v814
        %v842 = vpack.c.b16 %v817, %v816
        %v843 = vpack.c.b16 %v819, %v818
        %v844 = vpack.c.b16 %v821, %v820
        %v845 = vpack.c.b16 %v823, %v822
        %v846 = vpack.c.b16 %v825, %v824
        %v847 = vpack.c.b16 %v827, %v826
        %v848 = vpack.c.b16 %v829, %v828
        %v849 = vpack.c.b16 %v831, %v830
        %v850 = vpack.c.b16 %v833, %v832
        %v851 = vpack.c.b16 %v835, %v834
        %868 = vmatprep.subr.bf16.mxu0 0
        %869 = vmatpush1.bf16.msra.mxu0 %v836
        %870 = vmatprep.subr.bf16.mxu0 0
        %871 = vmatpush1.bf16.msra.mxu0 %v837
        %872 = vmatprep.subr.bf16.mxu0 0
        %873 = vmatpush1.bf16.msra.mxu0 %v838
        %874 = vmatprep.subr.bf16.mxu0 0
        %875 = vmatpush1.bf16.msra.mxu0 %v839
        %876 = vmatprep.subr.bf16.mxu0 0
        %877 = vmatpush1.bf16.msra.mxu0 %v840
        %878 = vmatprep.subr.bf16.mxu0 0
        %879 = vmatpush1.bf16.msra.mxu0 %v841
        %880 = vmatprep.subr.bf16.mxu0 0
        %881 = vmatpush1.bf16.msra.mxu0 %v842
        %882 = vmatprep.subr.bf16.mxu0 0
        %883 = vmatpush1.bf16.msra.mxu0 %v843
        %884 = vmatprep.subr.bf16.mxu0 0
        %885 = vmatpush1.bf16.msra.mxu0 %v844
        %886 = vmatprep.subr.bf16.mxu0 0
        %887 = vmatpush1.bf16.msra.mxu0 %v845
        %888 = vmatprep.subr.bf16.mxu0 0
        %889 = vmatpush1.bf16.msra.mxu0 %v846
        %890 = vmatprep.subr.bf16.mxu0 0
        %891 = vmatpush1.bf16.msra.mxu0 %v847
        %892 = vmatprep.subr.bf16.mxu0 0
        %893 = vmatpush1.bf16.msra.mxu0 %v848
        %894 = vmatprep.subr.bf16.mxu0 0
        %895 = vmatpush1.bf16.msra.mxu0 %v849
        %896 = vmatprep.subr.bf16.mxu0 0
        %897 = vmatpush1.bf16.msra.mxu0 %v850
        %898 = vmatprep.subr.bf16.mxu0 0
        %899 = vmatpush1.bf16.msra.mxu0 %v851
        %900 = vmatprep.mubr.bf16.mxu0 %v730
        %901 = vmatmul.mubr.bf16.gmra.mrb[0].mxu0 %v729
        %v902 = vpop.f32.mrb[0].mxu0
        %v903 = vadd.f32 %v770, %v902
        %v904 = vpop.f32.mrb[0].mxu0
        %v905 = vpop.f32.mrb[0].mxu0
        %v906 = vadd.f32 %v770, %v905
        %v907 = vpop.f32.mrb[0].mxu0
        %908 = vmatprep.mubr.bf16.mxu0 %v732
        %909 = vmatmul.mubr.bf16.gmra.mrb[0].mxu0 %v731
        %v910 = vpop.f32.mrb[0].mxu0
        %v911 = vadd.f32 %v770, %v910
        %v912 = vpop.f32.mrb[0].mxu0
        %v913 = vpop.f32.mrb[0].mxu0
        %v914 = vadd.f32 %v770, %v913
        %v915 = vpop.f32.mrb[0].mxu0
        %916 = vdwg.mxu0
        %v917 = vmax.f32 %v903, 0.0
        %v918 = vmax.f32 %v906, 0.0
        %v919 = vmax.f32 %v911, 0.0
        %v920 = vmax.f32 %v914, 0.0
        %v921 = vpack.c.bf16 %v918, %v917
        %v922 = vpack.c.bf16 %v920, %v919
        %v923 = vld [vmem:[#allocation10] sm:$0xf]
        %v924 = vld [vmem:[#allocation10 + $0x4] sm:$0xf]
        %v925 = vld [vmem:[#allocation10 + $0x8] sm:$0xf]
        %v926 = vld [vmem:[#allocation10 + $0xc] sm:$0xf]
        %v927 = vld [vmem:[#allocation10 + $0x10] sm:$0xf]
        %v928 = vld [vmem:[#allocation10 + $0x14] sm:$0xf]
        %v929 = vld [vmem:[#allocation10 + $0x18] sm:$0xf]
        %v930 = vld [vmem:[#allocation10 + $0x1c] sm:$0xf]
        %v931 = vld [vmem:[#allocation10 + $0x20] sm:$0xf]
        %v932 = vld [vmem:[#allocation10 + $0x24] sm:$0xf]
        %v933 = vld [vmem:[#allocation10 + $0x28] sm:$0xf]
        %v934 = vld [vmem:[#allocation10 + $0x2c] sm:$0xf]
        %v935 = vld [vmem:[#allocation10 + $0x30] sm:$0xf]
        %v936 = vld [vmem:[#allocation10 + $0x34] sm:$0xf]
        %v937 = vld [vmem:[#allocation10 + $0x38] sm:$0xf]
        %v938 = vld [vmem:[#allocation10 + $0x3c] sm:$0xf]
        %v939 = vld [vmem:[%s8] sm:$0x1]
        %v941 = vlaneseq
        %v942 = vshrl.u32 %v941, 7
        %v943 = vsub.s32 0, %v942
        %v944 = vrot.slane %v939, %v943
        %v962 = vunpack.c.l.b16 %v923
        %v963 = vunpack.c.l.b16 %v924
        %v964 = vunpack.c.l.b16 %v925
        %v965 = vunpack.c.l.b16 %v926
        %v966 = vunpack.c.l.b16 %v927
        %v967 = vunpack.c.l.b16 %v928
        %v968 = vunpack.c.l.b16 %v929
        %v969 = vunpack.c.l.b16 %v930
        %v970 = vunpack.c.l.b16 %v931
        %v971 = vunpack.c.l.b16 %v932
        %v972 = vunpack.c.l.b16 %v933
        %v973 = vunpack.c.l.b16 %v934
        %v974 = vunpack.c.l.b16 %v935
        %v975 = vunpack.c.l.b16 %v936
        %v976 = vunpack.c.l.b16 %v937
        %v977 = vunpack.c.l.b16 %v938
        %v978 = vpack.c.b16 %v963, %v962
        %v979 = vpack.c.b16 %v965, %v964
        %v980 = vpack.c.b16 %v967, %v966
        %v981 = vpack.c.b16 %v969, %v968
        %v982 = vpack.c.b16 %v971, %v970
        %v983 = vpack.c.b16 %v973, %v972
        %v984 = vpack.c.b16 %v975, %v974
        %v985 = vpack.c.b16 %v977, %v976
        %994 = vmatprep.subr.bf16.mxu0 0
        %995 = vmatpush1.bf16.msra.mxu0 %v978
        %996 = vmatprep.subr.bf16.mxu0 0
        %997 = vmatpush1.bf16.msra.mxu0 %v979
        %998 = vmatprep.subr.bf16.mxu0 0
        %999 = vmatpush1.bf16.msra.mxu0 %v980
        %1000 = vmatprep.subr.bf16.mxu0 0
        %1001 = vmatpush1.bf16.msra.mxu0 %v981
        %1002 = vmatprep.subr.bf16.mxu0 0
        %1003 = vmatpush1.bf16.msra.mxu0 %v982
        %1004 = vmatprep.subr.bf16.mxu0 0
        %1005 = vmatpush1.bf16.msra.mxu0 %v983
        %1006 = vmatprep.subr.bf16.mxu0 0
        %1007 = vmatpush1.bf16.msra.mxu0 %v984
        %1008 = vmatprep.subr.bf16.mxu0 0
        %1009 = vmatpush1.bf16.msra.mxu0 %v985
        %1010 = vmatprep.subr.bf16.mxu0 0
        %1011 = vmatpush1.bf16.msra.mxu0 0
        %1012 = vmatprep.subr.bf16.mxu0 0
        %1013 = vmatpush1.bf16.msra.mxu0 0
        %1014 = vmatprep.subr.bf16.mxu0 0
        %1015 = vmatpush1.bf16.msra.mxu0 0
        %1016 = vmatprep.subr.bf16.mxu0 0
        %1017 = vmatpush1.bf16.msra.mxu0 0
        %1018 = vmatprep.subr.bf16.mxu0 0
        %1019 = vmatpush1.bf16.msra.mxu0 0
        %1020 = vmatprep.subr.bf16.mxu0 0
        %1021 = vmatpush1.bf16.msra.mxu0 0
        %1022 = vmatprep.subr.bf16.mxu0 0
        %1023 = vmatpush1.bf16.msra.mxu0 0
        %1024 = vmatprep.subr.bf16.mxu0 0
        %1025 = vmatpush1.bf16.msra.mxu0 0
        %1026 = vmatprep.mubr.bf16.mxu0 0
        %1027 = vmatmul.mubr.bf16.gmra.mrb[0].mxu0 %v921
        %v1028 = vpop.f32.mrb[0].mxu0
        %v1029 = vadd.f32 %v944, %v1028
        %v1030 = vpop.f32.mrb[0].mxu0
        %v1031 = vpop.f32.mrb[0].mxu0
        %v1032 = vadd.f32 %v944, %v1031
        %v1033 = vpop.f32.mrb[0].mxu0
        %1034 = vmatprep.mubr.bf16.mxu0 0
        %1035 = vmatmul.mubr.bf16.gmra.mrb[0].mxu0 %v922
        %v1036 = vpop.f32.mrb[0].mxu0
        %v1037 = vadd.f32 %v944, %v1036
        %v1038 = vpop.f32.mrb[0].mxu0
        %v1039 = vpop.f32.mrb[0].mxu0
        %v1040 = vadd.f32 %v944, %v1039
        %v1041 = vpop.f32.mrb[0].mxu0
        %1042 = vdwg.mxu0
        %v1043 = vpack.c.bf16 %v1032, %v1029
        %v1044 = vpack.c.bf16 %v1040, %v1037
        %v1047 = vunpack.c.l.b16 %v1043
        %v1048 = vunpack.c.h.b16 %v1043
        %v1049 = vunpack.c.l.b16 %v1044
        %v1050 = vunpack.c.h.b16 %v1044
        %v1051 = vpack.c.b16 %v1047, %v1047
        %v1052 = vpack.c.b16 %v1048, %v1048
        %v1053 = vpack.c.b16 %v1049, %v1049
        %v1054 = vpack.c.b16 %v1050, %v1050
        %1059 = vst [vmem:[%s414] sm:$0xf] %v1051
        %1060 = vst [vmem:[%s414 + $0x4] sm:$0xf] %v1052
        %1061 = vst [vmem:[%s414 + $0x8] sm:$0xf] %v1053
        %1062 = vst [vmem:[%s414 + $0xc] sm:$0xf] %v1054
        %s1063 = sand.u32 %s230, 1
        %s1064 = scalar_lea.sflag [#allocation4], %s1063
        %s1065 = sand.u32 %s230, 1
        %s1066 = smul.addr %s1065, 16
        %s1067 = scalar_lea.vmem [#allocation11], %s1066
        // Predicated region
        $region77: #{tpu_custom_call.1} parent=55 // pred_check
          %p1068 = pneg %p240
        $region78: #{tpu_custom_call.1} parent=55 // pred_check_branch
          %1070 = sbr.rel (%p1068) target = $region80
        $region79: #{tpu_custom_call.1} parent=55 // pred_region
          %s1071 = smul.u32 4, %s28
          %s1072 = ssub.s32 5, %s1071
          %p1073 = scmp.lt.s32.totalorder %s1072, 4
          %s1074 = scalar_select %p1073, %s1072, 4
          %s1075 = smul.u32 64, %s1074
          %s1077 = ssub.s32 256, %s1075
          %1078 = vsyncadd %s1064, %s1077
          %p1079 = scmp.ne.s32.totalorder 0, %s1075
          %s1080 = smul.addr %s1071, 64
          %s1081 = scalar_lea.hbm %s9, %s1080
          %s1082 = smul.u32 4, %s1074
          %s1083 = sshll.u32 %s1067, 4
          %s1084 = int_to_ptr.vmem [resolvable:$true] %s1083
          %s1085 = sshll.u32 %s1082, 4
          %1089 = dma.vmem_to_hbm [thread:$0]  (%p1079), %s1084, %s1085, %s1081, %s1064, 64, 64, 4
        $region80: #{tpu_custom_call.1} parent=55 // pred_fallthru
          _
      $region56: #{tpu_custom_call.1} parent=5 // pred_fallthru
        _
      %p1090 = scmp.le.s32.totalorder 2, %s23
      // Predicated region
      $region81: #{tpu_custom_call.1} parent=5 // pred_check
        %p1091 = pneg %p1090
      $region82: #{tpu_custom_call.1} parent=5 // pred_check_branch
        %1093 = sbr.rel (%p1091) target = $region84
      $region83: #{tpu_custom_call.1} parent=5 // pred_region
        %s1094 = ssub.s32 %s23, 2
        // Predicated region
        $region85: #{tpu_custom_call.1} parent=83 // pred_check
          %p1095 = pneg %p246
        $region86: #{tpu_custom_call.1} parent=83 // pred_check_branch
          %1097 = sbr.rel (%p1095) target = $region88
        $region87: #{tpu_custom_call.1} parent=83 // pred_region
          %s1098 = sand.u32 %s231, 1
          %s1099 = scalar_lea.sflag [#allocation4], %s1098
          %s1100 = sand.u32 %s231, 1
          %s1101 = smul.addr %s1100, 16
          %s1102 = scalar_lea.vmem [#allocation11], %s1101
          %1103 = dma.done %s1099, 256
        $region88: #{tpu_custom_call.1} parent=83 // pred_fallthru
          _
      $region84: #{tpu_custom_call.1} parent=5 // pred_fallthru
        _
    $region6: #{tpu_custom_call.1} parent=1 // loop_footer
      %s27 = sadd.s32 1, %s23
    $region7: #{tpu_custom_call.1} parent=1 // loop_footer_branch
      %22 = sbr.rel target = $region3
    $region8: #{tpu_custom_call.1} parent=1 // loop_exit
      _
    %1104 = vsyncpa [#allocation3], 1
    %s1105 = scalar_lea.sflag [#allocation3], 1
    %1106 = vsyncpa %s1105, 1
    %1107 = vsyncpa [#allocation6], 1
    %1108 = vsyncpa [#allocation9], 1
    %1109 = vsyncpa [#allocation4], 1
    %s1110 = scalar_lea.sflag [#allocation4], 1
    %1111 = vsyncpa %s1110, 1

</llo_original>
